<compile_context>
chip_gen: v7x
topology: tpu7x:2x2x1
jax: 0.10.0
libtpu: 0.0.40
codegen_flags: <defaults>
</compile_context>

<pallas_src>
import functools

import jax
import jax.numpy as jnp
from jax import lax
from jax.experimental import pallas as pl
from jax.experimental.pallas import tpu as pltpu


def _round_up(x, m):
    return ((x + m - 1) // m) * m


ROW_TILE = 512  # rows per grid step at large N: 512x128 int32 = 256 KiB / input


def random_topk_kernel(keys_ref, items_ref, out_ref, *, topk, topk_pad, n):
    """Accumulate the items whose ranks are the `topk` largest.

    keys_ref : VMEM int32[tile_rows, 128] distinct ranks in [0, n); -1 pad
    items_ref: VMEM int32[tile_rows, 128] item ids, 0 in padded lanes
    out_ref  : VMEM int32[1, topk_pad] per-core accumulator (same block across
               the tile axis); column k holds the item with rank n-1-k.
    """
    @pl.when(pl.program_id(1) == 0)
    def _():
        out_ref[...] = jnp.zeros_like(out_ref)

    keys = keys_ref[...]
    items = items_ref[...]
    out_cols = lax.broadcasted_iota(jnp.int32, (1, topk_pad), 1)

    def body(k, acc):
        # Ranks are an exact permutation of [0, n): the k-th largest rank is
        # statically (n-1-k).  One VPU compare + one XLU sum per round, and
        # rounds are mutually independent (no keys rewrite, no serial max).
        hit = keys == ((n - 1) - k)
        picked = jnp.sum(jnp.where(hit, items, 0))  # 0 if rank not in this tile
        # Disjoint output columns -> plain add, contributions tree-combine.
        return acc + jnp.where(out_cols == k, picked, 0)

    partial = lax.fori_loop(
        0, topk, body, jnp.zeros((1, topk_pad), jnp.int32), unroll=True
    )
    out_ref[...] = out_ref[...] + partial


class RandomModel:
    """JAX/Pallas port of the PyTorch RandomModel."""

    def __init__(self, dims, topk):
        self.dims = dims
        self.topk = topk

    def forward(self):
        # The PyTorch forward is `pass` (returns None).
        return None

    def predict(self, interactions, key=None):
        assert interactions.shape[0] == 1, "need to be in test mode or batch_size=1"
        if key is None:
            key = jax.random.PRNGKey(0)

        items = interactions[0, :, 1].astype(jnp.int32)  # (N,)
        n = items.shape[0]
        assert self.topk <= n, "topk must not exceed number of interactions"

        # Distinct random ranks: top-k by these ranks == uniform sample
        # without replacement (distinctness guarantees unique hits).
        ranks = jax.random.permutation(key, n).astype(jnp.int32)

        # ---- layout / tiling ------------------------------------------------
        rows = _round_up(max(pl.cdiv(n, 128), 8), 8)       # sublane-dense rows
        if rows <= ROW_TILE:
            tile_rows, n_tiles = rows, 1
        else:
            tile_rows, n_tiles = ROW_TILE, pl.cdiv(rows, ROW_TILE)

        # Split row tiles across v7x's 2 TensorCores once there is enough work;
        # per-core partial (1, topk_pad) sums are added outside the kernel.
        n_cores = 2 if n_tiles >= 4 else 1
        tiles_per_core = pl.cdiv(n_tiles, n_cores)
        rows_p = n_cores * tiles_per_core * tile_rows
        n_flat = rows_p * 128

        items_p = (
            jnp.zeros((n_flat,), jnp.int32).at[:n].set(items).reshape(rows_p, 128)
        )
        keys_p = (
            jnp.full((n_flat,), -1, jnp.int32).at[:n].set(ranks).reshape(rows_p, 128)
        )

        topk_pad = _round_up(max(self.topk, 128), 128)

        kernel = functools.partial(
            random_topk_kernel, topk=self.topk, topk_pad=topk_pad, n=n
        )
        in_map = lambda c, t: (c * tiles_per_core + t, 0)

        out = pl.pallas_call(
            kernel,
            out_shape=jax.ShapeDtypeStruct((n_cores, topk_pad), jnp.int32),
            grid_spec=pltpu.PrefetchScalarGridSpec(
                num_scalar_prefetch=0,
                grid=(n_cores, tiles_per_core),
                in_specs=[
                    pl.BlockSpec((tile_rows, 128), in_map),
                    pl.BlockSpec((tile_rows, 128), in_map),
                ],
                out_specs=pl.BlockSpec((1, topk_pad), lambda c, t: (c, 0)),
            ),
            compiler_params=pltpu.CompilerParams(
                dimension_semantics=("parallel", "arbitrary"),
                vmem_limit_bytes=32 * 1024 * 1024,
            ),
        )(keys_p, items_p)

        # Each rank lives in exactly one tile/core -> summing partials is exact.
        sample = jnp.sum(out, axis=0)[: self.topk]
        # (1, topk) float32 — matches torch.Tensor(rand_list).unsqueeze(0).
        return sample.astype(jnp.float32)[None, :]


if __name__ == "__main__":
    key = jax.random.PRNGKey(0)

    # interactions: (batch=1, seq=8, 2) where column 1 holds item ids.
    n_items = 8
    ids_pool = 100 + jnp.arange(64, dtype=jnp.int32)
    item_ids = jax.random.permutation(key, ids_pool)[:n_items].reshape(1, n_items, 1)
    user_ids = jnp.zeros((1, n_items, 1), jnp.int32)
    interactions = jnp.concatenate([user_ids, item_ids], axis=-1)  # (1, 8, 2)

    model = RandomModel(dims=32, topk=4)
    _ = model.forward()  # no-op, as in the PyTorch module

    preds = model.predict(interactions, key=jax.random.PRNGKey(0))
    preds = jax.block_until_ready(preds)

    # sanity: correct shape, sampled items come from the item column, no repeats
    assert preds.shape == (1, 4), preds.shape
    item_set = set(int(v) for v in item_ids[0, :, 0])
    sampled = [int(v) for v in preds[0]]
    assert all(v in item_set for v in sampled), sampled
    assert len(set(sampled)) == len(sampled), sampled

    print("KERNEL_OK")
</pallas_src>

<mosaic_0001>
module attributes {stable_mosaic.version = 11 : i64} {
  func.func @random_topk_kernel(%arg0: i32, %arg1: i32, %arg2: memref<8x128xi32, #tpu.memory_space<vmem>>, %arg3: memref<8x128xi32, #tpu.memory_space<vmem>>, %arg4: memref<1x128xi32, #tpu.memory_space<vmem>>) attributes {dimension_semantics = [#tpu.dimension_semantics<parallel>, #tpu.dimension_semantics<arbitrary>], iteration_bounds = array<i64: 1, 1>, scalar_prefetch = 0 : i64, scratch_operands = 0 : i64, tpu.core_type = #tpu.core_type<tc>, window_params = [{transform_indices = @transform_0, window_bounds = array<i64: 8, 128>}, {transform_indices = @transform_1, window_bounds = array<i64: 8, 128>}, {transform_indices = @transform_2, window_bounds = array<i64: 1, 128>}]} {
    %c0_i32 = arith.constant 0 : i32
    %0 = arith.cmpi eq, %arg1, %c0_i32 : i32
    %1 = arith.extui %0 : i1 to i32
    %c0_i32_0 = arith.constant 0 : i32
    %2 = arith.cmpi ne, %1, %c0_i32_0 : i32
    scf.if %2 {
      %c0_i32_24 = arith.constant 0 : i32
      %70 = vector.broadcast %c0_i32_24 : i32 to vector<1x128xi32>
      %c0_25 = arith.constant 0 : index
      %c0_26 = arith.constant 0 : index
      %71 = vector.load %arg4[%c0_25, %c0_26] : memref<1x128xi32, #tpu.memory_space<vmem>>, vector<1x128xi32>
      tpu.vector_store %arg4[%c0_25, %c0_26], %70 {strides = array<i32>} : memref<1x128xi32, #tpu.memory_space<vmem>>, vector<1x128xi32>,
    } else {
    }
    %c0 = arith.constant 0 : index
    %c0_1 = arith.constant 0 : index
    %3 = vector.load %arg2[%c0, %c0_1] : memref<8x128xi32, #tpu.memory_space<vmem>>, vector<8x128xi32>
    %c0_2 = arith.constant 0 : index
    %c0_3 = arith.constant 0 : index
    %4 = vector.load %arg3[%c0_2, %c0_3] : memref<8x128xi32, #tpu.memory_space<vmem>>, vector<8x128xi32>
    %5 = tpu.iota {dimensions = array<i32: 1>} : vector<1x128xi32>
    %c0_i32_4 = arith.constant 0 : i32
    %6 = vector.broadcast %c0_i32_4 : i32 to vector<1x128xi32>
    %c0_i32_5 = arith.constant 0 : i32
    %c7_i32 = arith.constant 7 : i32
    %7 = arith.subi %c7_i32, %c0_i32_5 : i32
    %8 = vector.broadcast %7 : i32 to vector<8x128xi32>
    %9 = arith.cmpi eq, %3, %8 : vector<8x128xi32>
    %c0_i32_6 = arith.constant 0 : i32
    %10 = vector.broadcast %c0_i32_6 : i32 to vector<8x128xi32>
    %11 = arith.select %9, %4, %10 : vector<8x128xi1>, vector<8x128xi32>
    %12 = vector.shape_cast %11 : vector<8x128xi32> to vector<1x8x128xi32>
    %cst = arith.constant dense<0> : vector<1xi32>
    %13 = vector.multi_reduction <add>, %12, %cst [1, 2] : vector<1x8x128xi32> to vector<1xi32>
    %14 = vector.shape_cast %13 : vector<1xi32> to vector<1x1x1xi32>
    %15 = vector.extract %14[0, 0, 0] : i32 from vector<1x1x1xi32>
    %16 = vector.broadcast %c0_i32_5 : i32 to vector<1x128xi32>
    %17 = arith.cmpi eq, %5, %16 : vector<1x128xi32>
    %c0_i32_7 = arith.constant 0 : i32
    %18 = vector.broadcast %15 : i32 to vector<1x128xi32>
    %19 = vector.broadcast %c0_i32_7 : i32 to vector<1x128xi32>
    %20 = arith.select %17, %18, %19 : vector<1x128xi1>, vector<1x128xi32>
    %21 = arith.addi %6, %20 : vector<1x128xi32>
    %c1_i32 = arith.constant 1 : i32
    %c7_i32_8 = arith.constant 7 : i32
    %22 = arith.subi %c7_i32_8, %c1_i32 : i32
    %23 = vector.broadcast %22 : i32 to vector<8x128xi32>
    %24 = arith.cmpi eq, %3, %23 : vector<8x128xi32>
    %c0_i32_9 = arith.constant 0 : i32
    %25 = vector.broadcast %c0_i32_9 : i32 to vector<8x128xi32>
    %26 = arith.select %24, %4, %25 : vector<8x128xi1>, vector<8x128xi32>
    %27 = vector.shape_cast %26 : vector<8x128xi32> to vector<1x8x128xi32>
    %cst_10 = arith.constant dense<0> : vector<1xi32>
    %28 = vector.multi_reduction <add>, %27, %cst_10 [1, 2] : vector<1x8x128xi32> to vector<1xi32>
    %29 = vector.shape_cast %28 : vector<1xi32> to vector<1x1x1xi32>
    %30 = vector.extract %29[0, 0, 0] : i32 from vector<1x1x1xi32>
    %31 = vector.broadcast %c1_i32 : i32 to vector<1x128xi32>
    %32 = arith.cmpi eq, %5, %31 : vector<1x128xi32>
    %c0_i32_11 = arith.constant 0 : i32
    %33 = vector.broadcast %30 : i32 to vector<1x128xi32>
    %34 = vector.broadcast %c0_i32_11 : i32 to vector<1x128xi32>
    %35 = arith.select %32, %33, %34 : vector<1x128xi1>, vector<1x128xi32>
    %36 = arith.addi %21, %35 : vector<1x128xi32>
    %c2_i32 = arith.constant 2 : i32
    %c7_i32_12 = arith.constant 7 : i32
    %37 = arith.subi %c7_i32_12, %c2_i32 : i32
    %38 = vector.broadcast %37 : i32 to vector<8x128xi32>
    %39 = arith.cmpi eq, %3, %38 : vector<8x128xi32>
    %c0_i32_13 = arith.constant 0 : i32
    %40 = vector.broadcast %c0_i32_13 : i32 to vector<8x128xi32>
    %41 = arith.select %39, %4, %40 : vector<8x128xi1>, vector<8x128xi32>
    %42 = vector.shape_cast %41 : vector<8x128xi32> to vector<1x8x128xi32>
    %cst_14 = arith.constant dense<0> : vector<1xi32>
    %43 = vector.multi_reduction <add>, %42, %cst_14 [1, 2] : vector<1x8x128xi32> to vector<1xi32>
    %44 = vector.shape_cast %43 : vector<1xi32> to vector<1x1x1xi32>
    %45 = vector.extract %44[0, 0, 0] : i32 from vector<1x1x1xi32>
    %46 = vector.broadcast %c2_i32 : i32 to vector<1x128xi32>
    %47 = arith.cmpi eq, %5, %46 : vector<1x128xi32>
    %c0_i32_15 = arith.constant 0 : i32
    %48 = vector.broadcast %45 : i32 to vector<1x128xi32>
    %49 = vector.broadcast %c0_i32_15 : i32 to vector<1x128xi32>
    %50 = arith.select %47, %48, %49 : vector<1x128xi1>, vector<1x128xi32>
    %51 = arith.addi %36, %50 : vector<1x128xi32>
    %c3_i32 = arith.constant 3 : i32
    %c7_i32_16 = arith.constant 7 : i32
    %52 = arith.subi %c7_i32_16, %c3_i32 : i32
    %53 = vector.broadcast %52 : i32 to vector<8x128xi32>
    %54 = arith.cmpi eq, %3, %53 : vector<8x128xi32>
    %c0_i32_17 = arith.constant 0 : i32
    %55 = vector.broadcast %c0_i32_17 : i32 to vector<8x128xi32>
    %56 = arith.select %54, %4, %55 : vector<8x128xi1>, vector<8x128xi32>
    %57 = vector.shape_cast %56 : vector<8x128xi32> to vector<1x8x128xi32>
    %cst_18 = arith.constant dense<0> : vector<1xi32>
    %58 = vector.multi_reduction <add>, %57, %cst_18 [1, 2] : vector<1x8x128xi32> to vector<1xi32>
    %59 = vector.shape_cast %58 : vector<1xi32> to vector<1x1x1xi32>
    %60 = vector.extract %59[0, 0, 0] : i32 from vector<1x1x1xi32>
    %61 = vector.broadcast %c3_i32 : i32 to vector<1x128xi32>
    %62 = arith.cmpi eq, %5, %61 : vector<1x128xi32>
    %c0_i32_19 = arith.constant 0 : i32
    %63 = vector.broadcast %60 : i32 to vector<1x128xi32>
    %64 = vector.broadcast %c0_i32_19 : i32 to vector<1x128xi32>
    %65 = arith.select %62, %63, %64 : vector<1x128xi1>, vector<1x128xi32>
    %66 = arith.addi %51, %65 : vector<1x128xi32>
    %c4_i32 = arith.constant 4 : i32
    %c0_20 = arith.constant 0 : index
    %c0_21 = arith.constant 0 : index
    %67 = vector.load %arg4[%c0_20, %c0_21] : memref<1x128xi32, #tpu.memory_space<vmem>>, vector<1x128xi32>
    %68 = arith.addi %67, %66 : vector<1x128xi32>
    %c0_22 = arith.constant 0 : index
    %c0_23 = arith.constant 0 : index
    %69 = vector.load %arg4[%c0_22, %c0_23] : memref<1x128xi32, #tpu.memory_space<vmem>>, vector<1x128xi32>
    tpu.vector_store %arg4[%c0_22, %c0_23], %68 {strides = array<i32>} : memref<1x128xi32, #tpu.memory_space<vmem>>, vector<1x128xi32>,
    return
  }
  func.func @transform_0(%arg0: i32, %arg1: i32) -> (i32, i32) {
    %c1_i32 = arith.constant 1 : i32
    %0 = arith.muli %arg0, %c1_i32 : i32
    %1 = arith.addi %0, %arg1 : i32
    %c0_i32 = arith.constant 0 : i32
    %c0_i32_0 = arith.constant 0 : i32
    return %1, %c0_i32 : i32, i32
  }
  func.func @transform_1(%arg0: i32, %arg1: i32) -> (i32, i32) {
    %c1_i32 = arith.constant 1 : i32
    %0 = arith.muli %arg0, %c1_i32 : i32
    %1 = arith.addi %0, %arg1 : i32
    %c0_i32 = arith.constant 0 : i32
    %c0_i32_0 = arith.constant 0 : i32
    return %1, %c0_i32 : i32, i32
  }
  func.func @transform_2(%arg0: i32, %arg1: i32) -> (i32, i32) {
    %c0_i32 = arith.constant 0 : i32
    %c0_i32_0 = arith.constant 0 : i32
    return %arg0, %c0_i32 : i32, i32
  }
}

</mosaic_0001>

<llo_original>
// kernel: tpu_custom_call.1
$region0: #{tpu_custom_call.1}
  #allocation0 [shape = 'u32[]', space=smem, size = 0x4, offset = 0x4, fixed_abs, tag = 'smem constant byte address 0x4 - core index']
  #allocation1 [shape = 'u32[144,128]{1,0:T(1,128)}', space=vmem, size = 0x12000, scoped, tag = 'internal scratch']
  %s0 = inlined_call_operand.hbm [shape: s32[8,128], index: 0, kind: input, shape index: {}]
  %s1 = inlined_call_operand.hbm [shape: s32[8,128], index: 1, kind: input, shape index: {}]
  %s2 = inlined_call_operand.hbm [shape: s32[1,128], index: 2, kind: output, shape index: {}]
  %s3 = sld [smem:[#allocation0]]
  $region30: #{tpu_custom_call.1} parent=0
    _
  %s5 = ssub.s32 1, %s3
  %s6 = scalar_select 0, %s5, %s3
  $region1: #{tpu_custom_call.1} parent=0
    #allocation2 [shape = 'u8[4096]{0}', space=vmem, size = 0x1000, scoped, tag = 'input window, operand 0, single buffered']
    #allocation3 [shape = 's32[1]{0}', space=sflag, size = 0x4, scoped, tag = 'scoped memory for tpu_custom_call.1']
    #allocation4 [shape = 's32[1]{0}', space=sflag, size = 0x4, scoped, tag = 'scoped memory for tpu_custom_call.1']
    #allocation5 [shape = 'u8[4096]{0}', space=vmem, size = 0x1000, scoped, tag = 'input window, operand 1, single buffered']
    #allocation6 [shape = 's32[1]{0}', space=sflag, size = 0x4, scoped, tag = 'scoped memory for tpu_custom_call.1']
    #allocation7 [shape = 'u8[512]{0}', space=vmem, size = 0x400, scoped, tag = 'output window, operand 0, single buffered']
    %7 = vsyncpa [#allocation3], 0
    %8 = vsyncpa [#allocation6], 0
    %9 = vsyncpa [#allocation4], 0
    // Predicated region
    $region2: #{tpu_custom_call.1} parent=1 // pred_check
      _
    $region3: #{tpu_custom_call.1} parent=1 // pred_check_branch
      %11 = sbr.rel (0) target = $region5
    $region4: #{tpu_custom_call.1} parent=1 // pred_region
      %s12 = sadd.s32 0, 0
      %s14 = ssub.s32 128, 128
      %15 = vsyncadd [#allocation3], %s14
      %s16 = smul.addr %s12, 128
      %s17 = scalar_lea.hbm %s0, %s16
      %s19 = sshll.u32 [#allocation2], 4
      %s20 = int_to_ptr.vmem [resolvable:$true] %s19
      %22 = dma.hbm_to_vmem [thread:$0]  %s17, 128, %s20, [#allocation3]
    $region5: #{tpu_custom_call.1} parent=1 // pred_fallthru
      _
    // Predicated region
    $region6: #{tpu_custom_call.1} parent=1 // pred_check
      _
    $region7: #{tpu_custom_call.1} parent=1 // pred_check_branch
      %24 = sbr.rel (0) target = $region9
    $region8: #{tpu_custom_call.1} parent=1 // pred_region
      %s25 = sadd.s32 0, 0
      %s27 = ssub.s32 128, 128
      %28 = vsyncadd [#allocation6], %s27
      %s29 = smul.addr %s25, 128
      %s30 = scalar_lea.hbm %s1, %s29
      %s32 = sshll.u32 [#allocation5], 4
      %s33 = int_to_ptr.vmem [resolvable:$true] %s32
      %35 = dma.hbm_to_vmem [thread:$0]  %s30, 128, %s33, [#allocation6]
    $region9: #{tpu_custom_call.1} parent=1 // pred_fallthru
      _
    // Predicated region
    $region10: #{tpu_custom_call.1} parent=1 // pred_check
      _
    $region11: #{tpu_custom_call.1} parent=1 // pred_check_branch
      %37 = sbr.rel (0) target = $region13
    $region12: #{tpu_custom_call.1} parent=1 // pred_region
      %38 = dma.done [#allocation3], 128
    $region13: #{tpu_custom_call.1} parent=1 // pred_fallthru
      _
    // Predicated region
    $region14: #{tpu_custom_call.1} parent=1 // pred_check
      _
    $region15: #{tpu_custom_call.1} parent=1 // pred_check_branch
      %40 = sbr.rel (0) target = $region17
    $region16: #{tpu_custom_call.1} parent=1 // pred_region
      %41 = dma.done [#allocation6], 128
    $region17: #{tpu_custom_call.1} parent=1 // pred_fallthru
      _
    %s42 = sadd.s32 0, 0
    %s43 = sadd.s32 0, 0
    %p44 = scmp.eq.s32.totalorder 0, 0
    // Predicated region
    $region18: #{tpu_custom_call.1} parent=1 // pred_check
      %p45 = pneg %p44
    $region19: #{tpu_custom_call.1} parent=1 // pred_check_branch
      %47 = sbr.rel (%p45) target = $region21
    $region20: #{tpu_custom_call.1} parent=1 // pred_region
      %48 = vst [vmem:[#allocation7] sm:$0x1] 0
    $region21: #{tpu_custom_call.1} parent=1 // pred_fallthru
      _
    %v49 = vld [vmem:[#allocation2] sm:$0xff]
    %v50 = vld [vmem:[#allocation5] sm:$0xff]
    %v51 = vlaneseq
    %v52 = vand.u32 %v51, 127
    %vm53 = vcmp.eq.s32.totalorder %v49, 7
    %v54 = vsel %vm53, %v50, 0
    %v55 = vand.u32 %v54, 65535
    %v56 = vshrl.u32 %v54, 16
    %v57 = vcvt.s32.f32 %v55
    %v58 = vcvt.s32.f32 %v56
    %59 = vadd.xlane.f32.xlu0 %v57
    %v60 = vpop.xlane.xlu0 %59
    %61 = vadd.xlane.f32.xlu0 %v58
    %v62 = vpop.xlane.xlu0 %61
    %v63 = vcvt.f32.s32 %v60
    %v64 = vcvt.f32.s32 %v62
    %v65 = vshll.u32 %v64, 16
    %v66 = vadd.s32 %v65, %v63
    %v67 = vrot.slane %v66, 4
    %v68 = vadd.s32 %v66, %v67
    %v69 = vrot.slane %v68, 2
    %v70 = vadd.s32 %v68, %v69
    %v71 = vrot.slane %v70, 1
    %v72 = vadd.s32 %v70, %v71
    %s73 = vtos %v72
    %vm74 = vcmp.eq.s32.totalorder %v52, 0
    %v75 = vstv %s73
    %v76 = vsel %vm74, %v75, 0
    %vm77 = vcmp.eq.s32.totalorder %v49, 6
    %v78 = vsel %vm77, %v50, 0
    %v79 = vand.u32 %v78, 65535
    %v80 = vshrl.u32 %v78, 16
    %v81 = vcvt.s32.f32 %v79
    %v82 = vcvt.s32.f32 %v80
    %83 = vadd.xlane.f32.xlu0 %v81
    %v84 = vpop.xlane.xlu0 %83
    %85 = vadd.xlane.f32.xlu0 %v82
    %v86 = vpop.xlane.xlu0 %85
    %v87 = vcvt.f32.s32 %v84
    %v88 = vcvt.f32.s32 %v86
    %v89 = vshll.u32 %v88, 16
    %v90 = vadd.s32 %v89, %v87
    %v91 = vrot.slane %v90, 4
    %v92 = vadd.s32 %v90, %v91
    %v93 = vrot.slane %v92, 2
    %v94 = vadd.s32 %v92, %v93
    %v95 = vrot.slane %v94, 1
    %v96 = vadd.s32 %v94, %v95
    %s97 = vtos %v96
    %vm98 = vcmp.eq.s32.totalorder %v52, 1
    %v99 = vstv %s97
    %v100 = vsel %vm98, %v99, 0
    %v101 = vadd.s32 %v76, %v100
    %vm102 = vcmp.eq.s32.totalorder %v49, 5
    %v103 = vsel %vm102, %v50, 0
    %v104 = vand.u32 %v103, 65535
    %v105 = vshrl.u32 %v103, 16
    %v106 = vcvt.s32.f32 %v104
    %v107 = vcvt.s32.f32 %v105
    %108 = vadd.xlane.f32.xlu0 %v106
    %v109 = vpop.xlane.xlu0 %108
    %110 = vadd.xlane.f32.xlu0 %v107
    %v111 = vpop.xlane.xlu0 %110
    %v112 = vcvt.f32.s32 %v109
    %v113 = vcvt.f32.s32 %v111
    %v114 = vshll.u32 %v113, 16
    %v115 = vadd.s32 %v114, %v112
    %v116 = vrot.slane %v115, 4
    %v117 = vadd.s32 %v115, %v116
    %v118 = vrot.slane %v117, 2
    %v119 = vadd.s32 %v117, %v118
    %v120 = vrot.slane %v119, 1
    %v121 = vadd.s32 %v119, %v120
    %s122 = vtos %v121
    %vm123 = vcmp.eq.s32.totalorder %v52, 2
    %v124 = vstv %s122
    %v125 = vsel %vm123, %v124, 0
    %v126 = vadd.s32 %v101, %v125
    %vm127 = vcmp.eq.s32.totalorder %v49, 4
    %v128 = vsel %vm127, %v50, 0
    %v129 = vand.u32 %v128, 65535
    %v130 = vshrl.u32 %v128, 16
    %v131 = vcvt.s32.f32 %v129
    %v132 = vcvt.s32.f32 %v130
    %133 = vadd.xlane.f32.xlu0 %v131
    %v134 = vpop.xlane.xlu0 %133
    %135 = vadd.xlane.f32.xlu0 %v132
    %v136 = vpop.xlane.xlu0 %135
    %v137 = vcvt.f32.s32 %v134
    %v138 = vcvt.f32.s32 %v136
    %v139 = vshll.u32 %v138, 16
    %v140 = vadd.s32 %v139, %v137
    %v141 = vrot.slane %v140, 4
    %v142 = vadd.s32 %v140, %v141
    %v143 = vrot.slane %v142, 2
    %v144 = vadd.s32 %v142, %v143
    %v145 = vrot.slane %v144, 1
    %v146 = vadd.s32 %v144, %v145
    %s147 = vtos %v146
    %vm148 = vcmp.eq.s32.totalorder %v52, 3
    %v149 = vstv %s147
    %v150 = vsel %vm148, %v149, 0
    %v151 = vadd.s32 %v126, %v150
    %v152 = vld [vmem:[#allocation7] sm:$0x1]
    %v153 = vadd.s32 %v152, %v151
    %154 = vst [vmem:[#allocation7] sm:$0x1] %v153
    // Predicated region
    $region22: #{tpu_custom_call.1} parent=1 // pred_check
      _
    $region23: #{tpu_custom_call.1} parent=1 // pred_check_branch
      %156 = sbr.rel (0) target = $region25
    $region24: #{tpu_custom_call.1} parent=1 // pred_region
      %s158 = ssub.s32 16, 16
      %159 = vsyncadd [#allocation4], %s158
      %s161 = sshll.u32 [#allocation7], 4
      %s162 = int_to_ptr.vmem [resolvable:$true] %s161
      %164 = dma.vmem_to_hbm [thread:$0]  %s162, 16, %s2, [#allocation4]
    $region25: #{tpu_custom_call.1} parent=1 // pred_fallthru
      _
    // Predicated region
    $region26: #{tpu_custom_call.1} parent=1 // pred_check
      _
    $region27: #{tpu_custom_call.1} parent=1 // pred_check_branch
      %166 = sbr.rel (0) target = $region29
    $region28: #{tpu_custom_call.1} parent=1 // pred_region
      %167 = dma.done [#allocation4], 16
    $region29: #{tpu_custom_call.1} parent=1 // pred_fallthru
      _
    %168 = vsyncpa [#allocation3], 1
    %169 = vsyncpa [#allocation6], 1
    %170 = vsyncpa [#allocation4], 1

</llo_original>
